<compile_context>
chip_gen: v7x
topology: tpu7x:2x2x1
jax: 0.10.0
libtpu: 0.0.40
codegen_flags: <defaults>
</compile_context>

<pallas_src>
import jax
import jax.numpy as jnp
from jax.experimental import pallas as pl
from jax.experimental.pallas import tpu as pltpu


def _round_up(v, m):
    return (v + m - 1) // m * m


# ---------------------------------------------------------------------------
# Kernel
# ---------------------------------------------------------------------------
def _make_kernel(f_g, nb):
    """Kernel factory; f_g (channel split point) and nb (batch rows per block)
    are static."""

    def kernel(gx_ref, w_ref, bw_ref, bpsi_ref, out_ref):
        bias = bw_ref[:, 0:1]                    # (F_int, 1) fused conv+BN bias
        wpsi = bw_ref[:, 1:2]                    # (F_int, 1) psi weight column
        bpsi = bpsi_ref[0]                       # scalar (SMEM)
        w = w_ref[...].astype(gx_ref.dtype)      # (F_int, F_g+F_l) [Wg | Wx]

        # Static unroll over the batch rows packed into this block.
        for b in range(nb):
            gx = gx_ref[b]                       # (F_g+F_l, TM) channels x lanes
            # Both 1x1 convs (+ folded BN) as a single MXU push, f32 accumulate.
            acc = jnp.dot(w, gx, preferred_element_type=jnp.float32)
            a = jnp.maximum(acc + bias, 0.0)     # (F_int, TM)
            # psi: (F_int -> 1) conv as VPU multiply + sublane (XLU) reduction;
            # lane-dense, no 1-column MXU matmul / MRF pop.
            p = jnp.sum(a * wpsi, axis=0, keepdims=True) + bpsi
            psi = jax.nn.sigmoid(p)              # (1, TM) f32
            x = gx_ref[b, f_g:, :].astype(jnp.float32)   # (F_l, TM)
            out_ref[b] = (x * psi).astype(out_ref.dtype)

    return kernel


# ---------------------------------------------------------------------------
# Tiling selection
# ---------------------------------------------------------------------------
def _pick_tiling(n, hw, c_in, f_l, f_int, io_itemsize, tile_m_hint, vmem_budget):
    """Pick (batch block nb, lane tile tile_m, num M tiles, step footprint)."""
    tile_m = max(128, min(_round_up(tile_m_hint, 128), _round_up(hw, 128)))

    def step_bytes(nb, tm):
        inp = nb * c_in * tm * io_itemsize       # one packed g|x block
        out = nb * f_l * tm * io_itemsize        # one output block
        acc = (nb + 1) * f_int * tm * 4          # live f32 intermediates
        return 3 * inp + 2 * out + acc           # 3-deep in, 2-deep out buffers

    # Large-channel configs: shrink tile_m until the nb=1 footprint fits the
    # VMEM budget (bounds the live (F_int, tile_m) f32 intermediate).
    while tile_m > 128 and step_bytes(1, tile_m) > vmem_budget:
        tile_m = max(128, _round_up(tile_m // 2, 128))

    num_m = pl.cdiv(hw, tile_m)

    # Batch-block so each input DMA moves ~>= 1 MiB at small channel counts,
    # but keep the parallel grid populated (>= 4 steps when the problem allows;
    # v7x has 2 TensorCores) and stay inside the VMEM budget.
    dma_target = 1 << 20
    min_steps = min(4, n * num_m)
    nb = 1
    for d in range(2, n + 1):
        if n % d:                                # keep full batch blocks only
            continue
        if (n // d) * num_m < min_steps:
            break
        if step_bytes(d, tile_m) > vmem_budget:
            break
        if nb * c_in * tile_m * io_itemsize >= dma_target:
            break
        nb = d
    return nb, tile_m, num_m, step_bytes(nb, tile_m)


# ---------------------------------------------------------------------------
# Wrapper
# ---------------------------------------------------------------------------
def attention_gate_pallas(g_nchw, x_nchw, params, *, tile_m=8192,
                          io_dtype=jnp.bfloat16):
    """AttentionGate forward.  g: (N, F_g, H, W), x: (N, F_l, H, W).

    Returns (N, F_l, H, W) in `io_dtype` (bf16 by default; pass
    io_dtype=jnp.float32 for exact-precision I/O).
    """
    n, f_g, h, w_sp = g_nchw.shape
    f_l = x_nchw.shape[1]
    f_int = params["w"].shape[0]
    c_in = f_g + f_l
    hw = h * w_sp

    # NCHW -> (N, C, H*W): free reshape.  Pack g and x channel-wise so the
    # kernel sees one input stream.  (Upstream producers should emit this
    # packed bf16 layout directly; then this cast/concat costs no extra pass.)
    gx = jnp.concatenate(
        [g_nchw.reshape(n, f_g, hw).astype(io_dtype),
         x_nchw.reshape(n, f_l, hw).astype(io_dtype)], axis=1)

    io_itemsize = jnp.dtype(io_dtype).itemsize

    # VMEM budget from the actual chip: ~40 MiB on v7x (64 MiB/TC), 48 MiB cap
    # on v5e/v6e (128 MiB/TC).
    try:
        phys_vmem = int(pltpu.get_tpu_info().vmem_capacity_bytes)
    except Exception:
        phys_vmem = 128 << 20
    vmem_budget = int(min(48 << 20, phys_vmem * 5 // 8))

    nb, tm, num_m, step_fp = _pick_tiling(
        n, hw, c_in, f_l, f_int, io_itemsize, tile_m, vmem_budget)
    grid = (n // nb, num_m)

    weight_bytes = (f_int * c_in + 2 * f_int + 1) * 4
    vmem_limit = int(min(max(step_fp + 8 * weight_bytes + (2 << 20), 16 << 20),
                         vmem_budget))

    # Deeper input pipelining only when per-step DMAs are unavoidably small
    # (tiny HW per batch); hides DMA issue latency behind short compute.
    deep_in = nb * c_in * tm * io_itemsize < (512 << 10)

    def call(deep):
        in_kwargs = {"pipeline_mode": pl.Buffered(3)} if deep else {}
        gx_spec = pl.BlockSpec((nb, c_in, tm), lambda i, j: (i, 0, j), **in_kwargs)
        return pl.pallas_call(
            _make_kernel(f_g, nb),
            out_shape=jax.ShapeDtypeStruct((n, f_l, hw), io_dtype),
            grid_spec=pltpu.PrefetchScalarGridSpec(
                num_scalar_prefetch=0,
                grid=grid,
                in_specs=[
                    gx_spec,                                          # packed g|x
                    pl.BlockSpec((f_int, c_in), lambda i, j: (0, 0)),  # [Wg|Wx]
                    pl.BlockSpec((f_int, 2), lambda i, j: (0, 0)),     # [bias|wpsi]
                    pl.BlockSpec(memory_space=pltpu.MemorySpace.SMEM),  # bpsi
                ],
                out_specs=pl.BlockSpec((nb, f_l, tm), lambda i, j: (i, 0, j)),
            ),
            compiler_params=pltpu.CompilerParams(
                dimension_semantics=("parallel", "parallel"),
                vmem_limit_bytes=vmem_limit),
        )(gx, params["w"], params["bw"], params["bpsi"])

    try:
        out_cm = call(deep_in)
    except Exception:
        if not deep_in:
            raise
        out_cm = call(False)      # fall back to default double-buffering

    # No post-call slice needed: output last dim is exactly HW.
    return out_cm.reshape(n, f_l, h, w_sp)


# ---------------------------------------------------------------------------
# Deterministic parameter construction (PyTorch module shapes) and eval-mode
# BatchNorm folding into the 1x1 conv weights.
# ---------------------------------------------------------------------------
def make_raw_params(key, f_g, f_l, f_int):
    ks = jax.random.split(key, 9)
    wg = 0.1 * jax.random.normal(ks[0], (f_int, f_g), jnp.float32)
    bg = 0.1 * jax.random.normal(ks[1], (f_int,), jnp.float32)
    wx = 0.1 * jax.random.normal(ks[2], (f_int, f_l), jnp.float32)
    bx = 0.1 * jax.random.normal(ks[3], (f_int,), jnp.float32)
    wpsi = 0.1 * jax.random.normal(ks[4], (1, f_int), jnp.float32)
    bpsi = 0.1 * jax.random.normal(ks[5], (1,), jnp.float32)

    def bn(k, c):
        k1, k2, k3, k4 = jax.random.split(k, 4)
        return (1.0 + 0.1 * jax.random.normal(k1, (c,), jnp.float32),
                0.1 * jax.random.normal(k2, (c,), jnp.float32),
                0.1 * jax.random.normal(k3, (c,), jnp.float32),
                jax.random.uniform(k4, (c,), jnp.float32, minval=0.5, maxval=1.5))

    return {"wg": wg, "bg": bg, "wx": wx, "bx": bx, "wpsi": wpsi, "bpsi": bpsi,
            "bn_g": bn(ks[6], f_int), "bn_x": bn(ks[7], f_int), "bn_p": bn(ks[8], 1)}


def _fold_conv_bn(w, b, gamma, beta, rmean, rvar, eps=1e-5):
    # w: (C_out, C_in); bias/BN params: (C_out,). Eval-mode BN folded exactly.
    s = gamma / jnp.sqrt(rvar + eps)
    return w * s[:, None], (b - rmean) * s + beta


def fold_params(raw):
    """Fold BN (eval) into the convs and consolidate the tiny parameters."""
    wg, bg = _fold_conv_bn(raw["wg"], raw["bg"], *raw["bn_g"])
    wx, bx = _fold_conv_bn(raw["wx"], raw["bx"], *raw["bn_x"])
    wpsi, bpsi = _fold_conv_bn(raw["wpsi"], raw["bpsi"], *raw["bn_p"])
    return {
        "w": jnp.concatenate([wg, wx], axis=1),        # (F_int, F_g+F_l)
        "bw": jnp.stack([bg + bx, wpsi[0]], axis=1),   # (F_int, 2): [bias | wpsi]
        "bpsi": bpsi.reshape(1),                       # (1,) SMEM scalar
    }


# ---------------------------------------------------------------------------
# Pure-JAX references.
# ---------------------------------------------------------------------------
def attention_gate_ref_raw(g, x, raw, eps=1e-5):
    """conv1x1 + BatchNorm(eval) + relu + conv1x1 + BN + sigmoid gate."""
    n, f_g, h, w_sp = g.shape
    f_l = x.shape[1]
    gm = g.reshape(n, f_g, -1)
    xm = x.reshape(n, f_l, -1)

    def conv_bn(z, w, b, bn):
        gamma, beta, rmean, rvar = bn
        y = jnp.einsum("oc,ncm->nom", w, z) + b[None, :, None]
        s = (gamma / jnp.sqrt(rvar + eps))[None, :, None]
        return (y - rmean[None, :, None]) * s + beta[None, :, None]

    g1 = conv_bn(gm, raw["wg"], raw["bg"], raw["bn_g"])
    x1 = conv_bn(xm, raw["wx"], raw["bx"], raw["bn_x"])
    a = jnp.maximum(g1 + x1, 0.0)
    psi = jax.nn.sigmoid(conv_bn(a, raw["wpsi"], raw["bpsi"], raw["bn_p"]))
    return (xm * psi).reshape(n, f_l, h, w_sp)


def attention_gate_ref_folded(g, x, p):
    """Same folded/packed parameters as the kernel (tight comparison)."""
    n, f_g, h, w_sp = g.shape
    f_l = x.shape[1]
    gx = jnp.concatenate([g.reshape(n, f_g, -1), x.reshape(n, f_l, -1)], axis=1)
    a = jnp.maximum(jnp.einsum("oc,ncm->nom", p["w"], gx)
                    + p["bw"][None, :, 0:1], 0.0)
    psi = jax.nn.sigmoid(jnp.sum(a * p["bw"][None, :, 1:2], axis=1, keepdims=True)
                         + p["bpsi"][0])
    return (x.reshape(n, f_l, -1) * psi).reshape(n, f_l, h, w_sp)


if __name__ == "__main__":
    key = jax.random.PRNGKey(0)
    k_g, k_x, k_p, k_g2, k_x2 = jax.random.split(key, 5)

    # Small shapes consistent with the module: F_g = F_l = 4, F_int = 8.
    n, f_g, f_l, f_int, h, w_sp = 2, 4, 4, 8, 16, 16
    g = jax.random.normal(k_g, (n, f_g, h, w_sp), jnp.float32)
    x = jax.random.normal(k_x, (n, f_l, h, w_sp), jnp.float32)

    raw = make_raw_params(k_p, f_g, f_l, f_int)
    params = fold_params(raw)

    # Exact-precision I/O path: tight check against the folded reference and
    # the unfolded conv+BN(eval) module semantics.
    out32 = jax.block_until_ready(
        attention_gate_pallas(g, x, params, io_dtype=jnp.float32))
    assert out32.shape == (n, f_l, h, w_sp)
    ref_f = attention_gate_ref_folded(g, x, params)
    ref_raw = attention_gate_ref_raw(g, x, raw)
    assert jnp.allclose(out32, ref_f, atol=1e-5, rtol=1e-5)
    assert jnp.allclose(out32, ref_raw, atol=5e-3, rtol=5e-3)

    # Default (bf16 I/O) performance path: halved HBM bytes, f32 accumulation.
    out_bf = jax.block_until_ready(attention_gate_pallas(g, x, params))
    assert out_bf.dtype == jnp.bfloat16
    assert jnp.allclose(out_bf.astype(jnp.float32), ref_f, atol=5e-2, rtol=5e-2)

    # Ragged spatial extent (HW not a multiple of 128): exercises the in-kernel
    # partial-block handling that replaced the wrapper pad / slice HBM passes.
    h2, w2 = 10, 10
    g2 = jax.random.normal(k_g2, (n, f_g, h2, w2), jnp.float32)
    x2 = jax.random.normal(k_x2, (n, f_l, h2, w2), jnp.float32)
    out2 = jax.block_until_ready(
        attention_gate_pallas(g2, x2, params, io_dtype=jnp.float32))
    assert jnp.allclose(out2, attention_gate_ref_folded(g2, x2, params),
                        atol=1e-5, rtol=1e-5)

    print("KERNEL_OK")
</pallas_src>

<mosaic_0001>
module attributes {stable_mosaic.version = 11 : i64} {
  func.func @kernel(%arg0: i32, %arg1: i32, %arg2: memref<1x8x256xf32, #tpu.memory_space<vmem>>, %arg3: memref<8x8xf32, #tpu.memory_space<vmem>>, %arg4: memref<8x2xf32, #tpu.memory_space<vmem>>, %arg5: memref<1xf32, #tpu.memory_space<smem>>, %arg6: memref<1x4x256xf32, #tpu.memory_space<vmem>>) attributes {dimension_semantics = [#tpu.dimension_semantics<parallel>, #tpu.dimension_semantics<parallel>], iteration_bounds = array<i64: 2, 1>, scalar_prefetch = 0 : i64, scratch_operands = 0 : i64, tpu.core_type = #tpu.core_type<tc>, window_params = [{transform_indices = @transform_0, window_bounds = array<i64: 1, 8, 256>}, {pipeline_mode = #tpu.pipeline_mode<synchronous>, transform_indices = @transform_1, window_bounds = array<i64: 8, 8>}, {pipeline_mode = #tpu.pipeline_mode<synchronous>, transform_indices = @transform_2, window_bounds = array<i64: 8, 2>}, {transform_indices = @transform_3, window_bounds = array<i64: 1>}, {transform_indices = @transform_4, window_bounds = array<i64: 1, 4, 256>}]} {
    %c0 = arith.constant 0 : index
    %c0_0 = arith.constant 0 : index
    %0 = vector.load %arg4[%c0, %c0_0] : memref<8x2xf32, #tpu.memory_space<vmem>>, vector<8x1xf32>
    %c0_1 = arith.constant 0 : index
    %c1 = arith.constant 1 : index
    %1 = vector.load %arg4[%c0_1, %c1] : memref<8x2xf32, #tpu.memory_space<vmem>>, vector<8x1xf32>
    %c0_2 = arith.constant 0 : index
    %2 = memref.load %arg5[%c0_2] : memref<1xf32, #tpu.memory_space<smem>>
    %c0_3 = arith.constant 0 : index
    %c0_4 = arith.constant 0 : index
    %3 = vector.load %arg3[%c0_3, %c0_4] : memref<8x8xf32, #tpu.memory_space<vmem>>, vector<8x8xf32>
    %c0_5 = arith.constant 0 : index
    %c0_6 = arith.constant 0 : index
    %c0_7 = arith.constant 0 : index
    %4 = vector.load %arg2[%c0_5, %c0_6, %c0_7] : memref<1x8x256xf32, #tpu.memory_space<vmem>>, vector<1x8x256xf32>
    %5 = vector.shape_cast %4 : vector<1x8x256xf32> to vector<8x256xf32>
    %cst = arith.constant dense<0.000000e+00> : vector<8x256xf32>
    %6 = tpu.matmul %3, %5, %cst {dimension_numbers = #tpu.dot_dimension_numbers<[1], [0], [0], [1], [0, 0, 1, 1], [], []>} : vector<8x8xf32>, vector<8x256xf32>, vector<8x256xf32> -> vector<8x256xf32>
    %7 = vector.broadcast %0 : vector<8x1xf32> to vector<8x256xf32>
    %8 = arith.addf %6, %7 : vector<8x256xf32>
    %cst_8 = arith.constant 0.000000e+00 : f32
    %9 = vector.broadcast %cst_8 : f32 to vector<8x256xf32>
    %10 = arith.maximumf %8, %9 : vector<8x256xf32>
    %11 = vector.broadcast %1 : vector<8x1xf32> to vector<8x256xf32>
    %12 = arith.mulf %10, %11 : vector<8x256xf32>
    %cst_9 = arith.constant dense<0.000000e+00> : vector<256xf32>
    %13 = vector.multi_reduction <add>, %12, %cst_9 [0] : vector<8x256xf32> to vector<256xf32>
    %14 = vector.shape_cast %13 : vector<256xf32> to vector<1x256xf32>
    %15 = vector.broadcast %2 : f32 to vector<1x256xf32>
    %16 = arith.addf %14, %15 : vector<1x256xf32>
    %17 = arith.negf %16 : vector<1x256xf32>
    %18 = math.exp %17 : vector<1x256xf32>
    %cst_10 = arith.constant 1.000000e+00 : f32
    %19 = vector.broadcast %cst_10 : f32 to vector<1x256xf32>
    %20 = arith.addf %19, %18 : vector<1x256xf32>
    %21 = arith.divf %19, %20 : vector<1x256xf32>
    %c0_11 = arith.constant 0 : index
    %c4 = arith.constant 4 : index
    %c0_12 = arith.constant 0 : index
    %22 = vector.load %arg2[%c0_11, %c4, %c0_12] : memref<1x8x256xf32, #tpu.memory_space<vmem>>, vector<1x4x256xf32>
    %23 = vector.shape_cast %22 : vector<1x4x256xf32> to vector<4x256xf32>
    %24 = vector.broadcast %21 : vector<1x256xf32> to vector<4x256xf32>
    %25 = arith.mulf %23, %24 : vector<4x256xf32>
    %c0_13 = arith.constant 0 : index
    %c0_14 = arith.constant 0 : index
    %c0_15 = arith.constant 0 : index
    %26 = vector.load %arg6[%c0_13, %c0_14, %c0_15] : memref<1x4x256xf32, #tpu.memory_space<vmem>>, vector<1x4x256xf32>
    %27 = vector.shape_cast %26 : vector<1x4x256xf32> to vector<4x256xf32>
    %28 = vector.shape_cast %25 : vector<4x256xf32> to vector<1x4x256xf32>
    tpu.vector_store %arg6[%c0_13, %c0_14, %c0_15], %28 {strides = array<i32>} : memref<1x4x256xf32, #tpu.memory_space<vmem>>, vector<1x4x256xf32>,
    return
  }
  func.func @transform_0(%arg0: i32, %arg1: i32) -> (i32, i32, i32) {
    %c0_i32 = arith.constant 0 : i32
    %c0_i32_0 = arith.constant 0 : i32
    return %arg0, %c0_i32, %arg1 : i32, i32, i32
  }
  func.func @transform_1(%arg0: i32, %arg1: i32) -> (i32, i32) {
    %c0_i32 = arith.constant 0 : i32
    %c0_i32_0 = arith.constant 0 : i32
    %c0_i32_1 = arith.constant 0 : i32
    return %c0_i32, %c0_i32_0 : i32, i32
  }
  func.func @transform_2(%arg0: i32, %arg1: i32) -> (i32, i32) {
    %c0_i32 = arith.constant 0 : i32
    %c0_i32_0 = arith.constant 0 : i32
    %c0_i32_1 = arith.constant 0 : i32
    return %c0_i32, %c0_i32_0 : i32, i32
  }
  func.func @transform_3(%arg0: i32, %arg1: i32) -> i32 {
    %c0_i32 = arith.constant 0 : i32
    %c0_i32_0 = arith.constant 0 : i32
    return %c0_i32 : i32
  }
  func.func @transform_4(%arg0: i32, %arg1: i32) -> (i32, i32, i32) {
    %c0_i32 = arith.constant 0 : i32
    %c0_i32_0 = arith.constant 0 : i32
    return %arg0, %c0_i32, %arg1 : i32, i32, i32
  }
}

</mosaic_0001>

<llo_original>
// kernel: tpu_custom_call.1
$region0: #{tpu_custom_call.1}
  #allocation0 [shape = 'u32[]', space=smem, size = 0x4, offset = 0x4, fixed_abs, tag = 'smem constant byte address 0x4 - core index']
  #allocation1 [shape = 'u32[144,128]{1,0:T(1,128)}', space=vmem, size = 0x12000, scoped, tag = 'internal scratch']
  #allocation2 [shape = 'f32[1]{0:T(128)S(6)}', space=smem, size = 0x200, scoped, tag = 'scoped memory for tpu_custom_call.1']
  %s0 = inlined_call_operand.hbm [shape: f32[2,8,256], index: 0, kind: input, shape index: {}]
  %s1 = inlined_call_operand.vmem [shape: f32[8,8], index: 1, kind: input, shape index: {}]
  %s2 = inlined_call_operand.vmem [shape: f32[8,2], index: 2, kind: input, shape index: {}]
  %s3 = inlined_call_operand.<no memory space> [shape: f32[1], index: 3, kind: input, shape index: {}]
  %s4 = inlined_call_operand.hbm [shape: f32[2,4,256], index: 4, kind: output, shape index: {}]
  %s5 = sld [smem:[#allocation0]]
  $region53: #{tpu_custom_call.1} parent=0
    _
  %s7 = ssub.s32 1, %s5
  %s8 = scalar_select 0, %s7, %s5
  %9 = sst [smem:[#allocation2]] %s3
  $region1: #{tpu_custom_call.1} parent=0
    #allocation3 [shape = 'u8[16384]{0}', space=vmem, size = 0x4000, scoped, tag = 'input window, operand 0']
    #allocation4 [shape = 's32[2]{0}', space=sflag, size = 0x8, scoped, tag = 'scoped memory for tpu_custom_call.1']
    #allocation5 [shape = 's32[2]{0}', space=sflag, size = 0x8, scoped, tag = 'scoped memory for tpu_custom_call.1']
    #allocation6 [shape = 'u8[8192]{0}', space=vmem, size = 0x2000, scoped, tag = 'output window, operand 0']
    %10 = vsyncpa [#allocation4], 0
    %s11 = scalar_lea.sflag [#allocation4], 1
    %12 = vsyncpa %s11, 0
    %13 = vsyncpa [#allocation5], 0
    %s14 = scalar_lea.sflag [#allocation5], 1
    %15 = vsyncpa %s14, 0
    loop: start=0, step=1, limit=4
    $region2: #{tpu_custom_call.1} parent=1 // loop_pre_header
      _
    $region3: #{tpu_custom_call.1} parent=1 // loop_header
      %s17 = sphi 0, %s21
      %p18 = scmp.ge.s32.totalorder %s17, 4
      %s24 = sphi 0, %s36
      %s25 = sphi 0, %s32
      %s26 = sphi 0, %s24
      %s27 = sphi 0, %s25
      %s28 = sphi 0, %s26
      %s29 = sphi 0, %s27
      %s41 = sphi 0, %s43
      %s44 = sphi 0, %s41
      %s45 = sphi 0, %s44
      %s61 = sphi 0, %s45
      %s65 = sphi 0, %s65
      %s67 = sphi 0, %s65
      %s68 = sphi 0, %s67
      %s82 = sphi 0, %s68
      %s86 = sphi 0, %s86
      %s88 = sphi 0, %s86
      %s89 = sphi 0, %s88
      %s103 = sphi 0, %s89
      %s107 = sphi 0, %s107
      %s109 = sphi 0, %s107
      %s110 = sphi 0, %s109
      %s124 = sphi 0, %s110
      %s132 = sphi 0, %s134
      %s135 = sphi 0, %s132
      %s136 = sphi 0, %s135
      %s152 = sphi 0, %s136
    $region4: #{tpu_custom_call.1} parent=1 // loop_header_branch
      %20 = sbr.rel (%p18) target = $region8
    $region5: #{tpu_custom_call.1} parent=1 // loop_body
      %s22 = ssub.s32 %s17, 1
      %s23 = ssub.s32 %s17, 2
      %s30 = sadd.s32 1, %s25
      %p31 = scmp.ge.s32.totalorder %s30, 1
      %s32 = scalar_select %p31, 0, %s30
      %s33 = sadd.s32 1, %s24
      %s34 = scalar_select %p31, %s33, %s24
      %p35 = scmp.ge.s32.totalorder %s34, 2
      %s36 = scalar_select %p35, 0, %s34
      %s37 = ssub.s32 %s24, %s36
      %s38 = ssub.s32 %s25, %s32
      %s39 = sor.u32 %s37, %s38
      %p40 = scmp.eq.s32.totalorder %s39, 0
      %s42 = sadd.s32 %s41, 1
      %s43 = scalar_select %p40, %s41, %s42
      %p46 = pneg %p40
      %p47 = scmp.eq.s32.totalorder %s17, 1
      %p48 = por %p46, %p47
      %p49 = scmp.ne.s32.totalorder %s41, %s44
      %p50 = scmp.eq.s32.totalorder %s17, 0
      %p51 = por %p49, %p50
      %p52 = scmp.ne.s32.totalorder %s41, %s44
      %p53 = scmp.eq.s32.totalorder %s22, 1
      %p54 = por %p52, %p53
      %p55 = scmp.ne.s32.totalorder %s44, %s45
      %p56 = scmp.eq.s32.totalorder %s22, 0
      %p57 = por %p55, %p56
      %p58 = scmp.ne.s32.totalorder %s44, %s45
      %p59 = scmp.eq.s32.totalorder %s23, 1
      %p60 = por %p58, %p59
      %p62 = scmp.ne.s32.totalorder %s45, %s61
      %p63 = scmp.eq.s32.totalorder %s23, 0
      %p64 = por %p62, %p63
      %s66 = sadd.s32 %s65, 1
      %p69 = scmp.eq.s32.totalorder %s17, 1
      %p70 = scmp.ne.s32.totalorder %s65, %s67
      %p71 = scmp.eq.s32.totalorder %s17, 0
      %p72 = por %p70, %p71
      %p73 = scmp.ne.s32.totalorder %s65, %s67
      %p74 = scmp.eq.s32.totalorder %s22, 1
      %p75 = por %p73, %p74
      %p76 = scmp.ne.s32.totalorder %s67, %s68
      %p77 = scmp.eq.s32.totalorder %s22, 0
      %p78 = por %p76, %p77
      %p79 = scmp.ne.s32.totalorder %s67, %s68
      %p80 = scmp.eq.s32.totalorder %s23, 1
      %p81 = por %p79, %p80
      %p83 = scmp.ne.s32.totalorder %s68, %s82
      %p84 = scmp.eq.s32.totalorder %s23, 0
      %p85 = por %p83, %p84
      %s87 = sadd.s32 %s86, 1
      %p90 = scmp.eq.s32.totalorder %s17, 1
      %p91 = scmp.ne.s32.totalorder %s86, %s88
      %p92 = scmp.eq.s32.totalorder %s17, 0
      %p93 = por %p91, %p92
      %p94 = scmp.ne.s32.totalorder %s86, %s88
      %p95 = scmp.eq.s32.totalorder %s22, 1
      %p96 = por %p94, %p95
      %p97 = scmp.ne.s32.totalorder %s88, %s89
      %p98 = scmp.eq.s32.totalorder %s22, 0
      %p99 = por %p97, %p98
      %p100 = scmp.ne.s32.totalorder %s88, %s89
      %p101 = scmp.eq.s32.totalorder %s23, 1
      %p102 = por %p100, %p101
      %p104 = scmp.ne.s32.totalorder %s89, %s103
      %p105 = scmp.eq.s32.totalorder %s23, 0
      %p106 = por %p104, %p105
      %s108 = sadd.s32 %s107, 1
      %p111 = scmp.eq.s32.totalorder %s17, 1
      %p112 = scmp.ne.s32.totalorder %s107, %s109
      %p113 = scmp.eq.s32.totalorder %s17, 0
      %p114 = por %p112, %p113
      %p115 = scmp.ne.s32.totalorder %s107, %s109
      %p116 = scmp.eq.s32.totalorder %s22, 1
      %p117 = por %p115, %p116
      %p118 = scmp.ne.s32.totalorder %s109, %s110
      %p119 = scmp.eq.s32.totalorder %s22, 0
      %p120 = por %p118, %p119
      %p121 = scmp.ne.s32.totalorder %s109, %s110
      %p122 = scmp.eq.s32.totalorder %s23, 1
      %p123 = por %p121, %p122
      %p125 = scmp.ne.s32.totalorder %s110, %s124
      %p126 = scmp.eq.s32.totalorder %s23, 0
      %p127 = por %p125, %p126
      %s128 = ssub.s32 %s24, %s36
      %s129 = ssub.s32 %s25, %s32
      %s130 = sor.u32 %s128, %s129
      %p131 = scmp.eq.s32.totalorder %s130, 0
      %s133 = sadd.s32 %s132, 1
      %s134 = scalar_select %p131, %s132, %s133
      %p137 = pneg %p131
      %p138 = scmp.eq.s32.totalorder %s17, 1
      %p139 = por %p137, %p138
      %p140 = scmp.ne.s32.totalorder %s132, %s135
      %p141 = scmp.eq.s32.totalorder %s17, 0
      %p142 = por %p140, %p141
      %p143 = scmp.ne.s32.totalorder %s132, %s135
      %p144 = scmp.eq.s32.totalorder %s22, 1
      %p145 = por %p143, %p144
      %p146 = scmp.ne.s32.totalorder %s135, %s136
      %p147 = scmp.eq.s32.totalorder %s22, 0
      %p148 = por %p146, %p147
      %p149 = scmp.ne.s32.totalorder %s135, %s136
      %p150 = scmp.eq.s32.totalorder %s23, 1
      %p151 = por %p149, %p150
      %p153 = scmp.ne.s32.totalorder %s136, %s152
      %p154 = scmp.eq.s32.totalorder %s23, 0
      %p155 = por %p153, %p154
      %p156 = scmp.le.s32.totalorder 1, %s17
      %p157 = scmp.lt.s32.totalorder %s17, 3
      %p158 = pnand %p156, %p157
      %p159 = pneg %p158
      // Predicated region
      $region9: #{tpu_custom_call.1} parent=5 // pred_check
        _
      $region10: #{tpu_custom_call.1} parent=5 // pred_check_branch
        %161 = sbr.rel (%p158) target = $region12
      $region11: #{tpu_custom_call.1} parent=5 // pred_region
        %s162 = ssub.s32 %s17, 1
        // Predicated region
        $region13: #{tpu_custom_call.1} parent=11 // pred_check
          %p163 = pneg %p78
        $region14: #{tpu_custom_call.1} parent=11 // pred_check_branch
          %165 = sbr.rel (%p163) target = $region16
        $region15: #{tpu_custom_call.1} parent=11 // pred_region
          _
        $region16: #{tpu_custom_call.1} parent=11 // pred_fallthru
          _
        // Predicated region
        $region17: #{tpu_custom_call.1} parent=11 // pred_check
          %p166 = pneg %p99
        $region18: #{tpu_custom_call.1} parent=11 // pred_check_branch
          %168 = sbr.rel (%p166) target = $region20
        $region19: #{tpu_custom_call.1} parent=11 // pred_region
          _
        $region20: #{tpu_custom_call.1} parent=11 // pred_fallthru
          _
        // Predicated region
        $region21: #{tpu_custom_call.1} parent=11 // pred_check
          %p169 = pneg %p120
        $region22: #{tpu_custom_call.1} parent=11 // pred_check_branch
          %171 = sbr.rel (%p169) target = $region24
        $region23: #{tpu_custom_call.1} parent=11 // pred_region
          _
        $region24: #{tpu_custom_call.1} parent=11 // pred_fallthru
          _
      $region12: #{tpu_custom_call.1} parent=5 // pred_fallthru
        _
      %p172 = scmp.lt.s32.totalorder %s17, 2
      // Predicated region
      $region25: #{tpu_custom_call.1} parent=5 // pred_check
        %p173 = pneg %p172
      $region26: #{tpu_custom_call.1} parent=5 // pred_check_branch
        %175 = sbr.rel (%p173) target = $region28
      $region27: #{tpu_custom_call.1} parent=5 // pred_region
        // Predicated region
        $region29: #{tpu_custom_call.1} parent=27 // pred_check
          %p176 = pneg %p51
        $region30: #{tpu_custom_call.1} parent=27 // pred_check_branch
          %178 = sbr.rel (%p176) target = $region32
        $region31: #{tpu_custom_call.1} parent=27 // pred_region
          %s179 = sand.u32 %s41, 1
          %s180 = scalar_lea.sflag [#allocation4], %s179
          %s181 = sand.u32 %s41, 1
          %s182 = smul.addr %s181, 16
          %s183 = scalar_lea.vmem [#allocation3], %s182
          %s184 = smul.u32 2, %s25
          %s186 = ssub.s32 256, 256
          %187 = vsyncadd %s180, %s186
          %s188 = smul.addr %s24, 2
          %s189 = sadd.s32 %s184, %s188
          %s190 = smul.addr %s189, 128
          %s191 = scalar_lea.hbm %s0, %s190
          %s193 = sshll.u32 %s183, 4
          %s194 = int_to_ptr.vmem [resolvable:$true] %s193
          %196 = dma.hbm_to_vmem [thread:$0]  %s191, 256, %s194, %s180
        $region32: #{tpu_custom_call.1} parent=27 // pred_fallthru
          _
      $region28: #{tpu_custom_call.1} parent=5 // pred_fallthru
        _
      %p197 = scmp.le.s32.totalorder 1, %s17
      %p198 = scmp.lt.s32.totalorder %s17, 3
      %p199 = pnand %p197, %p198
      %p200 = pneg %p199
      // Predicated region
      $region33: #{tpu_custom_call.1} parent=5 // pred_check
        _
      $region34: #{tpu_custom_call.1} parent=5 // pred_check_branch
        %202 = sbr.rel (%p199) target = $region36
      $region35: #{tpu_custom_call.1} parent=5 // pred_region
        %s203 = ssub.s32 %s17, 1
        %s204 = sand.u32 %s44, 1
        %s205 = scalar_lea.sflag [#allocation4], %s204
        %s206 = sand.u32 %s44, 1
        %s207 = smul.addr %s206, 16
        %s208 = scalar_lea.vmem [#allocation3], %s207
        // Predicated region
        $region37: #{tpu_custom_call.1} parent=35 // pred_check
          %p209 = pneg %p57
        $region38: #{tpu_custom_call.1} parent=35 // pred_check_branch
          %211 = sbr.rel (%p209) target = $region40
        $region39: #{tpu_custom_call.1} parent=35 // pred_region
          %212 = dma.done %s205, 256
        $region40: #{tpu_custom_call.1} parent=35 // pred_fallthru
          _
        %s213 = sand.u32 %s44, 1
        %s214 = scalar_lea.sflag [#allocation4], %s213
        %s215 = sand.u32 %s44, 1
        %s216 = smul.addr %s215, 16
        %s217 = scalar_lea.vmem [#allocation3], %s216
        %p218 = pneg %p57
        %p219 = pneg %p54
        %p220 = pneg %p78
        %p221 = pneg %p75
        %p222 = pneg %p99
        %p223 = pneg %p96
        %p224 = pneg %p120
        %p225 = pneg %p117
        %p226 = pneg %p148
        %p227 = pneg %p145
        %s228 = sand.u32 %s135, 1
        %s229 = scalar_lea.sflag [#allocation5], %s228
        %s230 = sand.u32 %s135, 1
        %s231 = smul.addr %s230, 8
        %s232 = scalar_lea.vmem [#allocation6], %s231
        %s233 = smul.u32 2, %s27
        %s234 = smul.u32 2, %s27
        %v235 = vld [vmem:[%s2] sm:$0xff]
        %s236 = sld [smem:[#allocation2]]
        %v237 = vld [vmem:[%s1] sm:$0xff]
        %v238 = vld [vmem:[%s208] sm:$0xff]
        %v239 = vld [vmem:[%s208 + $0x8] sm:$0xff]
        %241 = vset.pattern.permute.xlu0 0
        %242 = vperm.xlu0 %241, %v235
        %v243 = vpop.permute.xlu0 %242
        %vm245 = vcmask 64512
        %v247 = vsel %vm245, %v237, 0
        %249 = vmatprep.subr.mxu0 %v239
        %250 = vmatpush1.msra.mxu0 %v238
        %251 = vmatprep.subr.mxu0 0.0
        %252 = vmatpush1.msra.mxu0 0.0
        %253 = vmatprep.subr.mxu0 0.0
        %254 = vmatpush1.msra.mxu0 0.0
        %255 = vmatprep.subr.mxu0 0.0
        %256 = vmatpush1.msra.mxu0 0.0
        %257 = vmatprep.subr.mxu0 0.0
        %258 = vmatpush1.msra.mxu0 0.0
        %259 = vmatprep.subr.mxu0 0.0
        %260 = vmatpush1.msra.mxu0 0.0
        %261 = vmatprep.subr.mxu0 0.0
        %262 = vmatpush1.msra.mxu0 0.0
        %263 = vmatprep.subr.mxu0 0.0
        %264 = vmatpush1.msra.mxu0 0.0
        %265 = vmatprep.subr.mxu0 0.0
        %266 = vmatpush1.msra.mxu0 0.0
        %267 = vmatprep.subr.mxu0 0.0
        %268 = vmatpush1.msra.mxu0 0.0
        %269 = vmatprep.subr.mxu0 0.0
        %270 = vmatpush1.msra.mxu0 0.0
        %271 = vmatprep.subr.mxu0 0.0
        %272 = vmatpush1.msra.mxu0 0.0
        %273 = vmatprep.subr.mxu0 0.0
        %274 = vmatpush1.msra.mxu0 0.0
        %275 = vmatprep.subr.mxu0 0.0
        %276 = vmatpush1.msra.mxu0 0.0
        %277 = vmatprep.subr.mxu0 0.0
        %278 = vmatpush1.msra.mxu0 0.0
        %279 = vmatprep.subr.mxu0 0.0
        %280 = vmatpush1.msra.mxu0 0.0
        %281 = vmatprep.subr.mxu0 0.0
        %282 = vmatpush1.msra.mxu0 0.0
        %283 = vmatprep.subr.mxu0 0.0
        %284 = vmatpush1.msra.mxu0 0.0
        %285 = vmatprep.subr.mxu0 0.0
        %286 = vmatpush1.msra.mxu0 0.0
        %287 = vmatprep.subr.mxu0 0.0
        %288 = vmatpush1.msra.mxu0 0.0
        %289 = vmatprep.subr.mxu0 0.0
        %290 = vmatpush1.msra.mxu0 0.0
        %291 = vmatprep.subr.mxu0 0.0
        %292 = vmatpush1.msra.mxu0 0.0
        %293 = vmatprep.subr.mxu0 0.0
        %294 = vmatpush1.msra.mxu0 0.0
        %295 = vmatprep.subr.mxu0 0.0
        %296 = vmatpush1.msra.mxu0 0.0
        %297 = vmatprep.subr.mxu0 0.0
        %298 = vmatpush1.msra.mxu0 0.0
        %299 = vmatprep.subr.mxu0 0.0
        %300 = vmatpush1.msra.mxu0 0.0
        %301 = vmatprep.subr.mxu0 0.0
        %302 = vmatpush1.msra.mxu0 0.0
        %303 = vmatprep.subr.mxu0 0.0
        %304 = vmatpush1.msra.mxu0 0.0
        %305 = vmatprep.subr.mxu0 0.0
        %306 = vmatpush1.msra.mxu0 0.0
        %307 = vmatprep.subr.mxu0 0.0
        %308 = vmatpush1.msra.mxu0 0.0
        %309 = vmatprep.subr.mxu0 0.0
        %310 = vmatpush1.msra.mxu0 0.0
        %311 = vmatprep.subr.mxu0 0.0
        %312 = vmatpush1.msra.mxu0 0.0
        %313 = vmatprep.mubr.f32.mxu0 0.0
        %314 = vmatmul.mubr.f32.gmra.mrb[0].mxu0 %v247
        %v315 = vpop.f32.mrb[0].mxu0
        %v316 = vadd.f32 %v243, %v315
        %v317 = vpop.f32.mrb[0].mxu0
        %v318 = vadd.f32 %v243, %v317
        %319 = vdwg.mxu0
        %v320 = vmax.f32 %v316, 0.0
        %v321 = vmax.f32 %v318, 0.0
        %322 = vset.pattern.permute.xlu0 1
        %323 = vperm.xlu0 %322, %v235
        %v324 = vpop.permute.xlu0 %323
        %v326 = vmul.f32 %v320, %v324
        %v327 = vmul.f32 %v321, %v324
        %v328 = vrot.slane %v326, 4
        %v329 = vadd.f32 %v326, %v328
        %v330 = vrot.slane %v329, 2
        %v331 = vadd.f32 %v329, %v330
        %v332 = vrot.slane %v331, 1
        %v333 = vadd.f32 %v331, %v332
        %v334 = vrot.slane %v327, 4
        %v335 = vadd.f32 %v327, %v334
        %v336 = vrot.slane %v335, 2
        %v337 = vadd.f32 %v335, %v336
        %v338 = vrot.slane %v337, 1
        %v339 = vadd.f32 %v337, %v338
        %v340 = vstv %s236
        %v341 = vadd.f32 %v333, %v340
        %v342 = vadd.f32 %v339, %v340
        %v343 = vxor.u32 %v341, 2147483648
        %v344 = vxor.u32 %v342, 2147483648
        %v345 = vmul.f32 %v343, 1.442695
        %v346 = vpow.pop %v345
        %v347 = vmul.f32 %v344, 1.442695
        %v348 = vpow.pop %v347
        %v349 = vadd.f32 %v346, 1.0
        %v350 = vadd.f32 %v348, 1.0
        %v351 = vrcp.pop %v349
        %v352 = vmul.f32 1.0, %v351
        %v353 = vrcp.pop %v350
        %v354 = vmul.f32 1.0, %v353
        %v355 = vld [vmem:[%s208] sm:$0xf0]
        %v356 = vld [vmem:[%s208 + $0x8] sm:$0xf0]
        %v357 = vmul.f32 %v355, %v352
        %v358 = vmul.f32 %v356, %v354
        %v361 = vcombine.high %v357, %v358
        %363 = vst [vmem:[%s232] sm:$0xff] %v361
        %s364 = sand.u32 %s135, 1
        %s365 = scalar_lea.sflag [#allocation5], %s364
        %s366 = sand.u32 %s135, 1
        %s367 = smul.addr %s366, 8
        %s368 = scalar_lea.vmem [#allocation6], %s367
        // Predicated region
        $region41: #{tpu_custom_call.1} parent=35 // pred_check
          %p369 = pneg %p145
        $region42: #{tpu_custom_call.1} parent=35 // pred_check_branch
          %371 = sbr.rel (%p369) target = $region44
        $region43: #{tpu_custom_call.1} parent=35 // pred_region
          %s372 = smul.u32 2, %s27
          %s374 = ssub.s32 128, 128
          %375 = vsyncadd %s365, %s374
          %s376 = smul.addr %s26, 2
          %s377 = sadd.s32 %s372, %s376
          %s378 = smul.addr %s377, 64
          %s379 = scalar_lea.hbm %s4, %s378
          %s381 = sshll.u32 %s368, 4
          %s382 = int_to_ptr.vmem [resolvable:$true] %s381
          %384 = dma.vmem_to_hbm [thread:$0]  %s382, 128, %s379, %s365
        $region44: #{tpu_custom_call.1} parent=35 // pred_fallthru
          _
      $region36: #{tpu_custom_call.1} parent=5 // pred_fallthru
        _
      %p385 = scmp.le.s32.totalorder 2, %s17
      // Predicated region
      $region45: #{tpu_custom_call.1} parent=5 // pred_check
        %p386 = pneg %p385
      $region46: #{tpu_custom_call.1} parent=5 // pred_check_branch
        %388 = sbr.rel (%p386) target = $region48
      $region47: #{tpu_custom_call.1} parent=5 // pred_region
        %s389 = ssub.s32 %s17, 2
        // Predicated region
        $region49: #{tpu_custom_call.1} parent=47 // pred_check
          %p390 = pneg %p151
        $region50: #{tpu_custom_call.1} parent=47 // pred_check_branch
          %392 = sbr.rel (%p390) target = $region52
        $region51: #{tpu_custom_call.1} parent=47 // pred_region
          %s393 = sand.u32 %s136, 1
          %s394 = scalar_lea.sflag [#allocation5], %s393
          %s395 = sand.u32 %s136, 1
          %s396 = smul.addr %s395, 8
          %s397 = scalar_lea.vmem [#allocation6], %s396
          %398 = dma.done %s394, 128
        $region52: #{tpu_custom_call.1} parent=47 // pred_fallthru
          _
      $region48: #{tpu_custom_call.1} parent=5 // pred_fallthru
        _
    $region6: #{tpu_custom_call.1} parent=1 // loop_footer
      %s21 = sadd.s32 1, %s17
    $region7: #{tpu_custom_call.1} parent=1 // loop_footer_branch
      %16 = sbr.rel target = $region3
    $region8: #{tpu_custom_call.1} parent=1 // loop_exit
      _
    %399 = vsyncpa [#allocation4], 1
    %s400 = scalar_lea.sflag [#allocation4], 1
    %401 = vsyncpa %s400, 1
    %402 = vsyncpa [#allocation5], 1
    %s403 = scalar_lea.sflag [#allocation5], 1
    %404 = vsyncpa %s403, 1

</llo_original>
